<compile_context>
chip_gen: v7x
topology: tpu7x:2x2x1
jax: 0.10.0
libtpu: 0.0.40
codegen_flags: <defaults>
</compile_context>

<pallas_src>
import functools

import numpy as np
import jax
import jax.numpy as jnp
from jax.experimental import pallas as pl
from jax.experimental.pallas import tpu as pltpu


def _gmm_pdf_kernel(x_ref, mu_ref, out_ref, *, a, b, c2, c):
    # x_ref  : VMEM (Bp, 2)   batched agent states, B on the sublane axis
    # mu_ref : VMEM (2, TK)   component means, K on the lane axis (lane-dense)
    # out_ref: VMEM (Bp, TK)  densities (padded rows/lanes hold finite garbage)
    x0 = x_ref[:, 0:1]                       # (Bp, 1)
    x1 = x_ref[:, 1:2]                       # (Bp, 1)

    mu = mu_ref[...]
    if mu.dtype != jnp.float32:              # bf16 storage option: upcast once
        mu = mu.astype(jnp.float32)
    mu0 = mu[0:1, :]                         # (1, TK)
    mu1 = mu[1:2, :]                         # (1, TK)

    d0 = x0 - mu0                            # (Bp, TK) broadcast (VPU)
    d1 = x1 - mu1

    # Quadratic form d^T cov d with -0.5 pre-folded into a / b / c2 (pure VPU;
    # cross term dropped at trace time when cov is diagonal).
    q = a * (d0 * d0) + c2 * (d1 * d1)
    if b != 0.0:
        q = q + b * (d0 * d1)

    e = jnp.exp(q)                           # EUP slot
    out_ref[...] = e if c == 1.0 else c * e


def make_gmm_agent_forward(mu, cov=None, c=1.0, *, mu_dtype=jnp.float32,
                           lane_tile=32768):
    """One-time setup (transpose/pad mu, fold cov & c into constants).

    Returns a jitted forward(x) where x is (2,) -> (K,) (module-faithful) or
    (B, 2) -> (B, K) (batched agent states).  NOTE: cov and c are baked in at
    trace time; re-run this factory if they ever change.
    """
    mu = np.asarray(mu, dtype=np.float32)            # (K, 2)
    K = mu.shape[0]

    lane_tile = int(max(128, (int(lane_tile) // 128) * 128))
    Kp = max(128, ((K + 127) // 128) * 128)          # lane-dense width
    if Kp > lane_tile:                               # gridded path: tile-align
        Kp = ((K + lane_tile - 1) // lane_tile) * lane_tile

    mu_t = np.zeros((2, Kp), dtype=np.float32)
    mu_t[:, :K] = mu.T                               # K on the lane axis
    mu_t = jnp.asarray(mu_t, dtype=mu_dtype)         # optional bf16 (v6e/v7x)

    if cov is None:
        cov = 0.54 * np.eye(2, dtype=np.float32)
    cov = np.asarray(cov, dtype=np.float32)

    # Fold -0.5 and cov into compile-time scalar constants.
    a = float(-0.5 * cov[0, 0])
    b = float(-0.5 * (cov[0, 1] + cov[1, 0]))
    c2 = float(-0.5 * cov[1, 1])
    c = float(c)

    kernel = functools.partial(_gmm_pdf_kernel, a=a, b=b, c2=c2, c=c)

    def _build_call(Bp):
        if Kp <= lane_tile:
            # Single lane tile: whole arrays resident in VMEM, no grid.
            return pl.pallas_call(
                kernel,
                out_shape=jax.ShapeDtypeStruct((Bp, Kp), jnp.float32),
                in_specs=[
                    pl.BlockSpec(memory_space=pltpu.MemorySpace.VMEM),  # x
                    pl.BlockSpec(memory_space=pltpu.MemorySpace.VMEM),  # mu_t
                ],
                out_specs=pl.BlockSpec(memory_space=pltpu.MemorySpace.VMEM),
            )
        # Large K: shard the lane range across a parallel grid (uses both
        # TensorCores on v7x, keeps per-buffer VMEM well under the 64 MiB cap).
        return pl.pallas_call(
            kernel,
            out_shape=jax.ShapeDtypeStruct((Bp, Kp), jnp.float32),
            grid_spec=pltpu.PrefetchScalarGridSpec(
                num_scalar_prefetch=0,
                grid=(Kp // lane_tile,),
                in_specs=[
                    pl.BlockSpec((Bp, 2), lambda i: (0, 0)),            # x
                    pl.BlockSpec((2, lane_tile), lambda i: (0, i)),     # mu_t
                ],
                out_specs=pl.BlockSpec((Bp, lane_tile), lambda i: (0, i)),
            ),
            compiler_params=pltpu.CompilerParams(
                dimension_semantics=("parallel",)),
        )

    @jax.jit
    def forward(x):
        x = jnp.asarray(x, jnp.float32)       # no-op when already f32
        single = (x.ndim == 1)
        xb = x.reshape(1, 2) if single else x
        B = xb.shape[0]
        Bp = ((B + 7) // 8) * 8               # fill the 8-sublane vreg rows
        if Bp != B:
            xb = jnp.pad(xb, ((0, Bp - B), (0, 0)))
        out = _build_call(Bp)(xb, mu_t)       # (Bp, Kp) lane-dense slab
        out = out[:B, :K]
        return out[0] if single else out

    # TODO(synk): if B*Kp ever outgrows VMEM, add a second (sublane) grid axis
    # over Bp instead of keeping the whole batch resident.
    return forward


def gmm_agent_reference(x2d, mu, cov, c):
    # einsum form (no K x K intermediate) so it stays valid for large K.
    d = x2d[:, None, :] - mu[None, :, :]                      # (B, K, 2)
    q = jnp.einsum('bkd,de,bke->bk', d, cov, d)
    return c * jnp.exp(-0.5 * q)


if __name__ == "__main__":
    key = jax.random.PRNGKey(0)
    k_mu, k_x, k_mu2, k_xb = jax.random.split(key, 4)

    cov = 0.54 * jnp.eye(2, dtype=jnp.float32)                # MyGaussianPDF.cov
    c = 1.0                                                   # MyGaussianPDF.c

    # --- Test 1: module-faithful shapes (K=8 components, single x param) ---
    K = 8
    mu = jax.random.normal(k_mu, (K, 2), dtype=jnp.float32)       # Gaussian means
    x = 0.01 * jax.random.normal(k_x, (2,), dtype=jnp.float32)    # nn.Parameter(0.01*randn(2))

    forward = make_gmm_agent_forward(mu, cov, c)
    out = jax.block_until_ready(forward(x))
    ref = gmm_agent_reference(x[None, :], mu, cov, c)[0]
    assert out.shape == (K,)
    assert jnp.allclose(out, ref, atol=1e-5, rtol=1e-5), (out, ref)

    # --- Test 2: batched agent states + parallel lane-grid path ---
    K2, B2 = 300, 5
    mu2 = jax.random.normal(k_mu2, (K2, 2), dtype=jnp.float32)
    xb = 0.01 * jax.random.normal(k_xb, (B2, 2), dtype=jnp.float32)

    forward2 = make_gmm_agent_forward(mu2, cov, c, lane_tile=128)
    out2 = jax.block_until_ready(forward2(xb))
    ref2 = gmm_agent_reference(xb, mu2, cov, c)
    assert out2.shape == (B2, K2)
    assert jnp.allclose(out2, ref2, atol=1e-5, rtol=1e-5), (out2, ref2)

    print("KERNEL_OK")
</pallas_src>

<mosaic_0001>
module attributes {stable_mosaic.version = 11 : i64} {
  func.func @_gmm_pdf_kernel(%arg0: memref<8x2xf32, #tpu.memory_space<vmem>>, %arg1: memref<2x128xf32, #tpu.memory_space<vmem>>, %arg2: memref<8x128xf32, #tpu.memory_space<vmem>>) attributes {dimension_semantics = [], scalar_prefetch = 0 : i64, scratch_operands = 0 : i64, tpu.core_type = #tpu.core_type<tc>} {
    %c0 = arith.constant 0 : index
    %c0_0 = arith.constant 0 : index
    %0 = vector.load %arg0[%c0, %c0_0] : memref<8x2xf32, #tpu.memory_space<vmem>>, vector<8x1xf32>
    %c0_1 = arith.constant 0 : index
    %c1 = arith.constant 1 : index
    %1 = vector.load %arg0[%c0_1, %c1] : memref<8x2xf32, #tpu.memory_space<vmem>>, vector<8x1xf32>
    %c0_2 = arith.constant 0 : index
    %c0_3 = arith.constant 0 : index
    %2 = vector.load %arg1[%c0_2, %c0_3] : memref<2x128xf32, #tpu.memory_space<vmem>>, vector<2x128xf32>
    %3 = vector.extract_strided_slice %2 {offsets = [0, 0], sizes = [1, 128], strides = [1, 1]} : vector<2x128xf32> to vector<1x128xf32>
    %4 = vector.extract_strided_slice %2 {offsets = [1, 0], sizes = [1, 128], strides = [1, 1]} : vector<2x128xf32> to vector<1x128xf32>
    %5 = vector.broadcast %0 : vector<8x1xf32> to vector<8x128xf32>
    %6 = vector.broadcast %3 : vector<1x128xf32> to vector<8x128xf32>
    %7 = arith.subf %5, %6 : vector<8x128xf32>
    %8 = vector.broadcast %1 : vector<8x1xf32> to vector<8x128xf32>
    %9 = vector.broadcast %4 : vector<1x128xf32> to vector<8x128xf32>
    %10 = arith.subf %8, %9 : vector<8x128xf32>
    %11 = arith.mulf %7, %7 : vector<8x128xf32>
    %cst = arith.constant -2.700000e-01 : f32
    %12 = vector.broadcast %cst : f32 to vector<8x128xf32>
    %13 = arith.mulf %12, %11 : vector<8x128xf32>
    %14 = arith.mulf %10, %10 : vector<8x128xf32>
    %cst_4 = arith.constant -2.700000e-01 : f32
    %15 = vector.broadcast %cst_4 : f32 to vector<8x128xf32>
    %16 = arith.mulf %15, %14 : vector<8x128xf32>
    %17 = arith.addf %13, %16 : vector<8x128xf32>
    %18 = math.exp %17 : vector<8x128xf32>
    %c0_5 = arith.constant 0 : index
    %c0_6 = arith.constant 0 : index
    %19 = vector.load %arg2[%c0_5, %c0_6] : memref<8x128xf32, #tpu.memory_space<vmem>>, vector<8x128xf32>
    tpu.vector_store %arg2[%c0_5, %c0_6], %18 {strides = array<i32>} : memref<8x128xf32, #tpu.memory_space<vmem>>, vector<8x128xf32>,
    return
  }
}

</mosaic_0001>

<llo_original>
// kernel: forward.1
$region0: #{forward.1}
  #allocation0 [shape = 'u32[]', space=smem, size = 0x4, offset = 0x4, fixed_abs, tag = 'smem constant byte address 0x4 - core index']
  #allocation1 [shape = 'u32[144,128]{1,0:T(1,128)}', space=vmem, size = 0x12000, scoped, tag = 'internal scratch']
  %s0 = inlined_call_operand.vmem [shape: f32[8,2], index: 0, kind: input, shape index: {}]
  %s1 = inlined_call_operand.vmem [shape: f32[2,128], index: 1, kind: input, shape index: {}]
  %s2 = inlined_call_operand.vmem [shape: f32[8,128], index: 2, kind: output, shape index: {}]
  %s3 = sld [smem:[#allocation0]]
  $region18: #{forward.1} parent=0
    _
  %s5 = ssub.s32 1, %s3
  %s6 = scalar_select 0, %s5, %s3
  // Predicated region
  $region2: #{forward.1} parent=0 // pred_check
    _
  $region3: #{forward.1} parent=0 // pred_check_branch
    %8 = sbr.rel (0) target = $region5
  $region4: #{forward.1} parent=0 // pred_region
    _
  $region5: #{forward.1} parent=0 // pred_fallthru
    _
  // Predicated region
  $region6: #{forward.1} parent=0 // pred_check
    _
  $region7: #{forward.1} parent=0 // pred_check_branch
    %10 = sbr.rel (0) target = $region9
  $region8: #{forward.1} parent=0 // pred_region
    _
  $region9: #{forward.1} parent=0 // pred_fallthru
    _
  %v11 = vld [vmem:[%s0] sm:$0xff]
  %v12 = vld [vmem:[%s1] sm:$0x3]
  %14 = vset.pattern.permute.xlu0 0
  %15 = vperm.xlu0 %14, %v11
  %v16 = vpop.permute.xlu0 %15
  %v18 = vlaneseq
  %v19 = vshrl.u32 %v18, 7
  %v20 = vsub.s32 0, %v19
  %v21 = vrot.slane %v12, %v20
  %v22 = vsub.f32 %v16, %v21
  %23 = vset.pattern.permute.xlu0 1
  %24 = vperm.xlu0 %23, %v11
  %v25 = vpop.permute.xlu0 %24
  %v27 = vlaneseq
  %v28 = vshrl.u32 %v27, 7
  %v29 = vsub.s32 1, %v28
  %v30 = vrot.slane %v12, %v29
  %v31 = vsub.f32 %v25, %v30
  %v32 = vmul.f32 %v22, %v22
  %v33 = vmul.f32 %v32, -0.27
  %v34 = vmul.f32 %v31, %v31
  %v35 = vmul.f32 %v34, -0.27
  %v36 = vadd.f32 %v33, %v35
  %v37 = vmul.f32 %v36, 1.442695
  %v38 = vpow.pop %v37
  %39 = vst [vmem:[%s2] sm:$0xff] %v38
  // Predicated region
  $region10: #{forward.1} parent=0 // pred_check
    _
  $region11: #{forward.1} parent=0 // pred_check_branch
    %41 = sbr.rel (0) target = $region13
  $region12: #{forward.1} parent=0 // pred_region
    _
  $region13: #{forward.1} parent=0 // pred_fallthru
    _
  // Predicated region
  $region14: #{forward.1} parent=0 // pred_check
    _
  $region15: #{forward.1} parent=0 // pred_check_branch
    %43 = sbr.rel (0) target = $region17
  $region16: #{forward.1} parent=0 // pred_region
    _
  $region17: #{forward.1} parent=0 // pred_fallthru
    _

</llo_original>
